<compile_context>
chip_gen: v6e
topology: v6e:2x2x1
jax: 0.10.0
libtpu: 0.0.40
codegen_flags: <defaults>
</compile_context>

<pallas_src>
import jax
import jax.numpy as jnp
from jax.experimental import pallas as pl
from jax.experimental.pallas import tpu as pltpu

BN_EPS = 1e-5


def _channel_attention_kernel(x_ref, w_ref, bias_ref, o_ref):
    bt, C, L = x_ref.shape
    x = x_ref[...]                        # (bt, C, L) f32, native NCL layout
    w1 = w_ref[0]                         # (C, C) conv1x1 with folded BN
    w2 = w_ref[1]                         # (C, C) gating conv1x1
    b1 = bias_ref[:, 0:1]                 # (C, 1)
    b2 = bias_ref[:, 1:2]                 # (C, 1)

    # --- 1x1 conv (+ folded BN) + ReLU, batched over bt on the MXU ---
    w1b = jnp.broadcast_to(w1[None], (bt, C, C))
    y = jnp.einsum('boc,bcl->bol', w1b, x, preferred_element_type=jnp.float32)
    y = jnp.maximum(y + b1, 0.0)          # (bt, C, L)

    # --- global average pool over L: lane reduce (XLU slot, no relayout) ---
    pooled = jnp.mean(y, axis=-1, keepdims=True)        # (bt, C, 1)

    # --- gating 1x1 conv on the pooled vector (batched matvec) + sigmoid ---
    w2b = jnp.broadcast_to(w2[None], (bt, C, C))
    z = jnp.einsum('boc,bcz->boz', w2b, pooled,
                   preferred_element_type=jnp.float32) + b2
    gate = jax.nn.sigmoid(z)              # (bt, C, 1)

    # --- scale the input by the per-(batch, channel) gate (lane broadcast) ---
    o_ref[...] = (x * gate).astype(o_ref.dtype)


def _vmem_capacity_bytes():
    """Physical VMEM per TensorCore; conservative fallback = v7x's 64 MiB."""
    try:
        return int(pltpu.get_tpu_info().vmem_capacity_bytes)
    except Exception:
        return 64 * 1024 * 1024


def _pick_batch_tile(B, C, L, budget_bytes):
    """Largest bt dividing B whose per-step working set fits the VMEM budget.

    Capped at B//2 so the grid has >= 2 steps (lets "parallel" shard across
    both TensorCores on v7x; negligible overhead on single-TC chips).
    """
    def step_bytes(bt):
        blk = bt * C * L * 4               # one (bt, C, L) f32 block
        wbc = bt * C * C * 4               # per-step broadcast weights
        # 2x double-buffered input + 2x double-buffered output + y temp + w1b/w2b
        return 5 * blk + 2 * wbc

    if B >= 2:
        cands = [bt for bt in range(1, B // 2 + 1) if B % bt == 0]
    else:
        cands = [1]
    fitting = [bt for bt in cands if step_bytes(bt) <= budget_bytes]
    return max(fitting) if fitting else min(cands)


@jax.jit
def channel_attention(x, w1, b1, gamma, beta, mean, var, w2, b2):
    """x: (B, C, L) f32; w1/w2: (C, C); b1/b2/gamma/beta/mean/var: (C, 1)."""
    B, C, L = x.shape

    # ---- fold eval-mode BatchNorm into the first conv (wrapper side) ----
    inv_std = jax.lax.rsqrt(var + BN_EPS)          # (C, 1)
    scale = gamma * inv_std                        # (C, 1)
    w1f = scale * w1                               # row-wise scale of (C, C)
    b1f = scale * (b1 - mean) + beta               # (C, 1)

    weights = jnp.stack([w1f, w2], axis=0)         # (2, C, C) packed operand
    biases = jnp.concatenate([b1f, b2], axis=1)    # (C, 2)   packed operand

    # ---- generation-aware VMEM sizing & batch-tile selection ----
    capacity = _vmem_capacity_bytes()
    limit_cap = (capacity * 3) // 4                # stay well below physical VMEM
    budget = max(1 << 20, limit_cap - (4 << 20))   # per-step working-set budget
    bt = _pick_batch_tile(B, C, L, budget)

    step_bytes = (5 * bt * C * L * 4 + 2 * bt * C * C * 4
                  + 4 * C * C * 4 + 8 * C * 4)
    vmem_limit = int(min(limit_cap, max(32 << 20, step_bytes + (4 << 20))))

    flops = 2 * C * C * B * L + 2 * C * C * B + 3 * B * C * L
    bytes_accessed = 2 * B * C * L * 4 + 2 * C * C * 4 + 2 * C * 4

    out = pl.pallas_call(
        _channel_attention_kernel,
        out_shape=jax.ShapeDtypeStruct((B, C, L), x.dtype),
        grid_spec=pltpu.PrefetchScalarGridSpec(
            num_scalar_prefetch=0,
            grid=(B // bt,),
            in_specs=[
                pl.BlockSpec((bt, C, L), lambda g: (g, 0, 0)),   # x block (native)
                pl.BlockSpec((2, C, C), lambda g: (0, 0, 0)),    # packed weights
                pl.BlockSpec((C, 2), lambda g: (0, 0)),          # packed biases
            ],
            out_specs=pl.BlockSpec((bt, C, L), lambda g: (g, 0, 0)),
        ),
        compiler_params=pltpu.CompilerParams(
            dimension_semantics=("parallel",),       # megacore sharding on v7x
            vmem_limit_bytes=vmem_limit),
        cost_estimate=pl.CostEstimate(
            flops=flops, transcendentals=B * C, bytes_accessed=bytes_accessed),
    )(x, weights, biases)

    return out


def channel_attention_ref(x, w1, b1, gamma, beta, mean, var, w2, b2):
    """Plain-JAX reference (unfolded BN, eval mode) for correctness checking."""
    y = jnp.einsum('oi,bil->bol', w1, x) + b1[None]
    y = gamma[None] * (y - mean[None]) / jnp.sqrt(var[None] + BN_EPS) + beta[None]
    y = jnp.maximum(y, 0.0)
    p = jnp.mean(y, axis=2, keepdims=True)
    z = jnp.einsum('oi,bil->bol', w2, p) + b2[None]
    return x * jax.nn.sigmoid(z)


if __name__ == "__main__":
    B, C, L = 4, 16, 32     # small NCL input

    key = jax.random.PRNGKey(0)
    keys = jax.random.split(key, 9)

    x = jax.random.normal(keys[0], (B, C, L), dtype=jnp.float32)

    # Deterministic synthetic parameters (shapes follow the PyTorch __init__):
    #   ConvNorm1d.conv : Conv1d(C, C, 1) -> weight (C, C), bias (C,)
    #   ConvNorm1d.norm : BatchNorm1d(C)  -> gamma/beta/running_mean/running_var (C,)
    #   conv            : Conv1d(C, C, 1) -> weight (C, C), bias (C,)
    w1 = jax.random.normal(keys[1], (C, C), dtype=jnp.float32) * 0.3
    b1 = jax.random.normal(keys[2], (C, 1), dtype=jnp.float32) * 0.1
    gamma = 1.0 + 0.2 * jax.random.normal(keys[3], (C, 1), dtype=jnp.float32)
    beta = 0.1 * jax.random.normal(keys[4], (C, 1), dtype=jnp.float32)
    mean = 0.1 * jax.random.normal(keys[5], (C, 1), dtype=jnp.float32)
    var = 0.5 + jax.random.uniform(keys[6], (C, 1), dtype=jnp.float32)
    w2 = jax.random.normal(keys[7], (C, C), dtype=jnp.float32) * 0.3
    b2 = jax.random.normal(keys[8], (C, 1), dtype=jnp.float32) * 0.1

    out = channel_attention(x, w1, b1, gamma, beta, mean, var, w2, b2)
    out = jax.block_until_ready(out)

    ref = channel_attention_ref(x, w1, b1, gamma, beta, mean, var, w2, b2)
    assert out.shape == (B, C, L)
    assert jnp.allclose(out, ref, atol=1e-4, rtol=1e-4), "mismatch vs reference"

    print("KERNEL_OK")
</pallas_src>

<mosaic_0001>
module attributes {stable_mosaic.version = 11 : i64} {
  func.func @_channel_attention_kernel(%arg0: i32, %arg1: memref<2x16x32xf32, #tpu.memory_space<vmem>>, %arg2: memref<2x16x16xf32, #tpu.memory_space<vmem>>, %arg3: memref<16x2xf32, #tpu.memory_space<vmem>>, %arg4: memref<2x16x32xf32, #tpu.memory_space<vmem>>) attributes {dimension_semantics = [#tpu.dimension_semantics<parallel>], iteration_bounds = array<i64: 2>, scalar_prefetch = 0 : i64, scratch_operands = 0 : i64, tpu.core_type = #tpu.core_type<tc>, window_params = [{transform_indices = @transform_0, window_bounds = array<i64: 2, 16, 32>}, {pipeline_mode = #tpu.pipeline_mode<synchronous>, transform_indices = @transform_1, window_bounds = array<i64: 2, 16, 16>}, {pipeline_mode = #tpu.pipeline_mode<synchronous>, transform_indices = @transform_2, window_bounds = array<i64: 16, 2>}, {transform_indices = @transform_3, window_bounds = array<i64: 2, 16, 32>}]} {
    %c0 = arith.constant 0 : index
    %c0_0 = arith.constant 0 : index
    %c0_1 = arith.constant 0 : index
    %0 = vector.load %arg1[%c0, %c0_0, %c0_1] : memref<2x16x32xf32, #tpu.memory_space<vmem>>, vector<2x16x32xf32>
    %c0_2 = arith.constant 0 : index
    %c0_3 = arith.constant 0 : index
    %c0_4 = arith.constant 0 : index
    %1 = vector.load %arg2[%c0_2, %c0_3, %c0_4] : memref<2x16x16xf32, #tpu.memory_space<vmem>>, vector<1x16x16xf32>
    %2 = vector.shape_cast %1 : vector<1x16x16xf32> to vector<16x16xf32>
    %c1 = arith.constant 1 : index
    %c0_5 = arith.constant 0 : index
    %c0_6 = arith.constant 0 : index
    %3 = vector.load %arg2[%c1, %c0_5, %c0_6] : memref<2x16x16xf32, #tpu.memory_space<vmem>>, vector<1x16x16xf32>
    %4 = vector.shape_cast %3 : vector<1x16x16xf32> to vector<16x16xf32>
    %c0_7 = arith.constant 0 : index
    %c0_8 = arith.constant 0 : index
    %5 = vector.load %arg3[%c0_7, %c0_8] : memref<16x2xf32, #tpu.memory_space<vmem>>, vector<16x1xf32>
    %c0_9 = arith.constant 0 : index
    %c1_10 = arith.constant 1 : index
    %6 = vector.load %arg3[%c0_9, %c1_10] : memref<16x2xf32, #tpu.memory_space<vmem>>, vector<16x1xf32>
    %7 = vector.shape_cast %2 : vector<16x16xf32> to vector<1x16x16xf32>
    %8 = vector.shape_cast %7 : vector<1x16x16xf32> to vector<1x16x16xf32>
    %9 = vector.broadcast %8 : vector<1x16x16xf32> to vector<2x16x16xf32>
    "tpu.trace_start"() <{level = 10 : i32, message = "boc,bcl->bol"}> : () -> ()
    %cst = arith.constant dense<0.000000e+00> : vector<2x16x32xf32>
    %10 = tpu.matmul %9, %0, %cst {dimension_numbers = #tpu.dot_dimension_numbers<[2], [1], [1], [2], [0, 0, 0, 1, 1, 2], [0], [0]>} : vector<2x16x16xf32>, vector<2x16x32xf32>, vector<2x16x32xf32> -> vector<2x16x32xf32>
    "tpu.trace_stop"() : () -> ()
    %11 = vector.shape_cast %5 : vector<16x1xf32> to vector<1x16x1xf32>
    %12 = vector.broadcast %11 : vector<1x16x1xf32> to vector<2x16x32xf32>
    %13 = arith.addf %10, %12 : vector<2x16x32xf32>
    %cst_11 = arith.constant 0.000000e+00 : f32
    %14 = vector.broadcast %cst_11 : f32 to vector<2x16x32xf32>
    %15 = arith.maximumf %13, %14 : vector<2x16x32xf32>
    %cst_12 = arith.constant dense<0.000000e+00> : vector<2x16xf32>
    %16 = vector.multi_reduction <add>, %15, %cst_12 [2] : vector<2x16x32xf32> to vector<2x16xf32>
    %17 = vector.shape_cast %16 : vector<2x16xf32> to vector<2x16x1xf32>
    %cst_13 = arith.constant 3.200000e+01 : f32
    %18 = vector.broadcast %cst_13 : f32 to vector<2x16x1xf32>
    %19 = arith.divf %17, %18 : vector<2x16x1xf32>
    %20 = vector.shape_cast %4 : vector<16x16xf32> to vector<1x16x16xf32>
    %21 = vector.shape_cast %20 : vector<1x16x16xf32> to vector<1x16x16xf32>
    %22 = vector.broadcast %21 : vector<1x16x16xf32> to vector<2x16x16xf32>
    "tpu.trace_start"() <{level = 10 : i32, message = "boc,bcz->boz"}> : () -> ()
    %cst_14 = arith.constant dense<0.000000e+00> : vector<2x16x1xf32>
    %23 = tpu.matmul %22, %19, %cst_14 {dimension_numbers = #tpu.dot_dimension_numbers<[2], [1], [1], [2], [0, 0, 0, 1, 1, 2], [0], [0]>} : vector<2x16x16xf32>, vector<2x16x1xf32>, vector<2x16x1xf32> -> vector<2x16x1xf32>
    "tpu.trace_stop"() : () -> ()
    %24 = vector.shape_cast %6 : vector<16x1xf32> to vector<1x16x1xf32>
    %25 = vector.broadcast %24 : vector<1x16x1xf32> to vector<2x16x1xf32>
    %26 = arith.addf %23, %25 : vector<2x16x1xf32>
    %27 = arith.negf %26 : vector<2x16x1xf32>
    %28 = math.exp %27 : vector<2x16x1xf32>
    %cst_15 = arith.constant 1.000000e+00 : f32
    %29 = vector.broadcast %cst_15 : f32 to vector<2x16x1xf32>
    %30 = arith.addf %29, %28 : vector<2x16x1xf32>
    %31 = arith.divf %29, %30 : vector<2x16x1xf32>
    %32 = vector.broadcast %31 : vector<2x16x1xf32> to vector<2x16x32xf32>
    %33 = arith.mulf %0, %32 : vector<2x16x32xf32>
    %c0_16 = arith.constant 0 : index
    %c0_17 = arith.constant 0 : index
    %c0_18 = arith.constant 0 : index
    %34 = vector.load %arg4[%c0_16, %c0_17, %c0_18] : memref<2x16x32xf32, #tpu.memory_space<vmem>>, vector<2x16x32xf32>
    tpu.vector_store %arg4[%c0_16, %c0_17, %c0_18], %33 {strides = array<i32>} : memref<2x16x32xf32, #tpu.memory_space<vmem>>, vector<2x16x32xf32>,
    return
  }
  func.func @transform_0(%arg0: i32) -> (i32, i32, i32) {
    %c0_i32 = arith.constant 0 : i32
    %c0_i32_0 = arith.constant 0 : i32
    %c0_i32_1 = arith.constant 0 : i32
    return %arg0, %c0_i32, %c0_i32_0 : i32, i32, i32
  }
  func.func @transform_1(%arg0: i32) -> (i32, i32, i32) {
    %c0_i32 = arith.constant 0 : i32
    %c0_i32_0 = arith.constant 0 : i32
    %c0_i32_1 = arith.constant 0 : i32
    %c0_i32_2 = arith.constant 0 : i32
    return %c0_i32, %c0_i32_0, %c0_i32_1 : i32, i32, i32
  }
  func.func @transform_2(%arg0: i32) -> (i32, i32) {
    %c0_i32 = arith.constant 0 : i32
    %c0_i32_0 = arith.constant 0 : i32
    %c0_i32_1 = arith.constant 0 : i32
    return %c0_i32, %c0_i32_0 : i32, i32
  }
  func.func @transform_3(%arg0: i32) -> (i32, i32, i32) {
    %c0_i32 = arith.constant 0 : i32
    %c0_i32_0 = arith.constant 0 : i32
    %c0_i32_1 = arith.constant 0 : i32
    return %arg0, %c0_i32, %c0_i32_0 : i32, i32, i32
  }
}

</mosaic_0001>

<llo_original>
// kernel: channel_attention.1
$region0: #{channel_attention.1}
  #allocation0 [shape = 'u32[]', space=smem, size = 0x4, offset = 0x4, fixed_abs, tag = 'smem constant byte address 0x4 - core index']
  #allocation1 [shape = 'u32[144,128]{1,0:T(1,128)}', space=vmem, size = 0x12000, scoped, tag = 'internal scratch']
  %s0 = inlined_call_operand.vmem [shape: f32[4,16,32], index: 0, kind: input, shape index: {}]
  %s1 = inlined_call_operand.vmem [shape: f32[2,16,16], index: 1, kind: input, shape index: {}]
  %s2 = inlined_call_operand.vmem [shape: f32[16,2], index: 2, kind: input, shape index: {}]
  %s3 = inlined_call_operand.hbm [shape: f32[4,16,32], index: 3, kind: output, shape index: {}]
  %s4 = sld [smem:[#allocation0]]
  $region45: #{channel_attention.1} parent=0
    _
  %s6 = ssub.s32 1, %s4
  %s7 = scalar_select 0, %s6, %s4
  $region1: #{channel_attention.1} parent=0
    #allocation2 [shape = 'u8[32768]{0}', space=vmem, size = 0x8000, scoped, tag = 'output window, operand 0']
    #allocation3 [shape = 's32[2]{0}', space=sflag, size = 0x8, scoped, tag = 'scoped memory for channel_attention.1']
    %8 = vsyncpa [#allocation3], 0
    %s9 = scalar_lea.sflag [#allocation3], 1
    %10 = vsyncpa %s9, 0
    loop: start=0, step=1, limit=4
    $region2: #{channel_attention.1} parent=1 // loop_pre_header
      _
    $region3: #{channel_attention.1} parent=1 // loop_header
      %s12 = sphi 0, %s16
      %p13 = scmp.ge.s32.totalorder %s12, 4
      %s22 = sphi 0, %s24
      %s25 = sphi 0, %s22
      %s26 = sphi 0, %s25
      %s42 = sphi 0, %s26
      %s46 = sphi 0, %s46
      %s48 = sphi 0, %s46
      %s49 = sphi 0, %s48
      %s63 = sphi 0, %s49
      %s67 = sphi 0, %s67
      %s69 = sphi 0, %s67
      %s70 = sphi 0, %s69
      %s84 = sphi 0, %s70
      %s90 = sphi 0, %s92
      %s93 = sphi 0, %s90
      %s94 = sphi 0, %s93
      %s110 = sphi 0, %s94
    $region4: #{channel_attention.1} parent=1 // loop_header_branch
      %15 = sbr.rel (%p13) target = $region8
    $region5: #{channel_attention.1} parent=1 // loop_body
      %s17 = ssub.s32 %s12, 1
      %s18 = ssub.s32 %s12, 2
      %s19 = sadd.s32 %s12, 1
      %s20 = ssub.s32 %s12, %s19
      %p21 = scmp.eq.s32.totalorder %s20, 0
      %s23 = sadd.s32 %s22, 1
      %s24 = scalar_select %p21, %s22, %s23
      %p27 = pneg %p21
      %p28 = scmp.eq.s32.totalorder %s12, 1
      %p29 = por %p27, %p28
      %p30 = scmp.ne.s32.totalorder %s22, %s25
      %p31 = scmp.eq.s32.totalorder %s12, 0
      %p32 = por %p30, %p31
      %p33 = scmp.ne.s32.totalorder %s22, %s25
      %p34 = scmp.eq.s32.totalorder %s17, 1
      %p35 = por %p33, %p34
      %p36 = scmp.ne.s32.totalorder %s25, %s26
      %p37 = scmp.eq.s32.totalorder %s17, 0
      %p38 = por %p36, %p37
      %p39 = scmp.ne.s32.totalorder %s25, %s26
      %p40 = scmp.eq.s32.totalorder %s18, 1
      %p41 = por %p39, %p40
      %p43 = scmp.ne.s32.totalorder %s26, %s42
      %p44 = scmp.eq.s32.totalorder %s18, 0
      %p45 = por %p43, %p44
      %s47 = sadd.s32 %s46, 1
      %p50 = scmp.eq.s32.totalorder %s12, 1
      %p51 = scmp.ne.s32.totalorder %s46, %s48
      %p52 = scmp.eq.s32.totalorder %s12, 0
      %p53 = por %p51, %p52
      %p54 = scmp.ne.s32.totalorder %s46, %s48
      %p55 = scmp.eq.s32.totalorder %s17, 1
      %p56 = por %p54, %p55
      %p57 = scmp.ne.s32.totalorder %s48, %s49
      %p58 = scmp.eq.s32.totalorder %s17, 0
      %p59 = por %p57, %p58
      %p60 = scmp.ne.s32.totalorder %s48, %s49
      %p61 = scmp.eq.s32.totalorder %s18, 1
      %p62 = por %p60, %p61
      %p64 = scmp.ne.s32.totalorder %s49, %s63
      %p65 = scmp.eq.s32.totalorder %s18, 0
      %p66 = por %p64, %p65
      %s68 = sadd.s32 %s67, 1
      %p71 = scmp.eq.s32.totalorder %s12, 1
      %p72 = scmp.ne.s32.totalorder %s67, %s69
      %p73 = scmp.eq.s32.totalorder %s12, 0
      %p74 = por %p72, %p73
      %p75 = scmp.ne.s32.totalorder %s67, %s69
      %p76 = scmp.eq.s32.totalorder %s17, 1
      %p77 = por %p75, %p76
      %p78 = scmp.ne.s32.totalorder %s69, %s70
      %p79 = scmp.eq.s32.totalorder %s17, 0
      %p80 = por %p78, %p79
      %p81 = scmp.ne.s32.totalorder %s69, %s70
      %p82 = scmp.eq.s32.totalorder %s18, 1
      %p83 = por %p81, %p82
      %p85 = scmp.ne.s32.totalorder %s70, %s84
      %p86 = scmp.eq.s32.totalorder %s18, 0
      %p87 = por %p85, %p86
      %s88 = ssub.s32 %s12, %s19
      %p89 = scmp.eq.s32.totalorder %s88, 0
      %s91 = sadd.s32 %s90, 1
      %s92 = scalar_select %p89, %s90, %s91
      %p95 = pneg %p89
      %p96 = scmp.eq.s32.totalorder %s12, 1
      %p97 = por %p95, %p96
      %p98 = scmp.ne.s32.totalorder %s90, %s93
      %p99 = scmp.eq.s32.totalorder %s12, 0
      %p100 = por %p98, %p99
      %p101 = scmp.ne.s32.totalorder %s90, %s93
      %p102 = scmp.eq.s32.totalorder %s17, 1
      %p103 = por %p101, %p102
      %p104 = scmp.ne.s32.totalorder %s93, %s94
      %p105 = scmp.eq.s32.totalorder %s17, 0
      %p106 = por %p104, %p105
      %p107 = scmp.ne.s32.totalorder %s93, %s94
      %p108 = scmp.eq.s32.totalorder %s18, 1
      %p109 = por %p107, %p108
      %p111 = scmp.ne.s32.totalorder %s94, %s110
      %p112 = scmp.eq.s32.totalorder %s18, 0
      %p113 = por %p111, %p112
      %p114 = scmp.le.s32.totalorder 1, %s12
      %p115 = scmp.lt.s32.totalorder %s12, 3
      %p116 = pnand %p114, %p115
      %p117 = pneg %p116
      // Predicated region
      $region9: #{channel_attention.1} parent=5 // pred_check
        _
      $region10: #{channel_attention.1} parent=5 // pred_check_branch
        %119 = sbr.rel (%p116) target = $region12
      $region11: #{channel_attention.1} parent=5 // pred_region
        %s120 = ssub.s32 %s12, 1
        // Predicated region
        $region13: #{channel_attention.1} parent=11 // pred_check
          %p121 = pneg %p59
        $region14: #{channel_attention.1} parent=11 // pred_check_branch
          %123 = sbr.rel (%p121) target = $region16
        $region15: #{channel_attention.1} parent=11 // pred_region
          _
        $region16: #{channel_attention.1} parent=11 // pred_fallthru
          _
        // Predicated region
        $region17: #{channel_attention.1} parent=11 // pred_check
          %p124 = pneg %p80
        $region18: #{channel_attention.1} parent=11 // pred_check_branch
          %126 = sbr.rel (%p124) target = $region20
        $region19: #{channel_attention.1} parent=11 // pred_region
          _
        $region20: #{channel_attention.1} parent=11 // pred_fallthru
          _
      $region12: #{channel_attention.1} parent=5 // pred_fallthru
        _
      %p127 = scmp.lt.s32.totalorder %s12, 2
      // Predicated region
      $region21: #{channel_attention.1} parent=5 // pred_check
        %p128 = pneg %p127
      $region22: #{channel_attention.1} parent=5 // pred_check_branch
        %130 = sbr.rel (%p128) target = $region24
      $region23: #{channel_attention.1} parent=5 // pred_region
        // Predicated region
        $region25: #{channel_attention.1} parent=23 // pred_check
          %p131 = pneg %p32
        $region26: #{channel_attention.1} parent=23 // pred_check_branch
          %133 = sbr.rel (%p131) target = $region28
        $region27: #{channel_attention.1} parent=23 // pred_region
          %s134 = smul.u32 2, %s12
          %p135 = scmp.lt.s32.totalorder %s134, 3
          %s136 = scalar_select %p135, %s134, 3
          %s137 = smul.addr %s136, 2
          %s138 = smul.addr %s137, 8
          %s139 = scalar_lea.vmem %s0, %s138
          %s140 = smul.u32 2, %s12
        $region28: #{channel_attention.1} parent=23 // pred_fallthru
          _
      $region24: #{channel_attention.1} parent=5 // pred_fallthru
        _
      %p141 = scmp.le.s32.totalorder 1, %s12
      %p142 = scmp.lt.s32.totalorder %s12, 3
      %p143 = pnand %p141, %p142
      %p144 = pneg %p143
      // Predicated region
      $region29: #{channel_attention.1} parent=5 // pred_check
        _
      $region30: #{channel_attention.1} parent=5 // pred_check_branch
        %146 = sbr.rel (%p143) target = $region32
      $region31: #{channel_attention.1} parent=5 // pred_region
        %s147 = ssub.s32 %s12, 1
        %s148 = smul.u32 2, %s17
        %p149 = scmp.lt.s32.totalorder %s148, 3
        %s150 = scalar_select %p149, %s148, 3
        %s151 = smul.addr %s150, 2
        %s152 = smul.addr %s151, 8
        %s153 = scalar_lea.vmem %s0, %s152
        %p154 = pneg %p38
        %p155 = pneg %p35
        %p156 = pneg %p59
        %p157 = pneg %p56
        %p158 = pneg %p80
        %p159 = pneg %p77
        %p160 = pneg %p106
        %p161 = pneg %p103
        %s162 = sand.u32 %s93, 1
        %s163 = scalar_lea.sflag [#allocation3], %s162
        %s164 = sand.u32 %s93, 1
        %s165 = smul.addr %s164, 32
        %s166 = scalar_lea.vmem [#allocation2], %s165
        %s167 = smul.u32 2, %s17
        %p168 = scmp.lt.s32.totalorder %s167, 3
        %s169 = scalar_select %p168, %s167, 3
        %s170 = smul.addr %s169, 2
        %s171 = smul.addr %s170, 8
        %s172 = scalar_lea.vmem %s0, %s171
        %s173 = smul.u32 2, %s17
        %s174 = smul.u32 2, %s17
        %v175 = vld [vmem:[%s172] sm:$0xff]
        %v176 = vld [vmem:[%s172 + $0x8] sm:$0xff]
        %v177 = vld [vmem:[%s172 + $0x10] sm:$0xff]
        %v178 = vld [vmem:[%s172 + $0x18] sm:$0xff]
        %v179 = vld [vmem:[%s1] sm:$0xff]
        %v180 = vld [vmem:[%s1 + $0x8] sm:$0xff]
        %s181 = scalar_lea.vmem %s1, 16
        %v182 = vld [vmem:[%s181] sm:$0xff]
        %v183 = vld [vmem:[%s181 + $0x8] sm:$0xff]
        %v184 = vld [vmem:[%s2] sm:$0xff]
        %v185 = vld [vmem:[%s2 + $0x8] sm:$0xff]
        %187 = vset.pattern.permute.xlu0 0
        %188 = vperm.xlu0 %187, %v184
        %v189 = vpop.permute.xlu0 %188
        %192 = vset.pattern.permute.xlu0 0
        %193 = vperm.xlu0 %192, %v185
        %v194 = vpop.permute.xlu0 %193
        %vm196 = vcmask 130048
        %v198 = vsel %vm196, %v179, 0
        %v201 = vsel %vm196, %v180, 0
        %203 = vmatprep.subr.mxu0 0.0
        %204 = vmatpush1.msra.mxu0 0.0
        %205 = vmatprep.subr.mxu0 0.0
        %206 = vmatpush1.msra.mxu0 0.0
        %207 = vmatprep.subr.mxu0 0.0
        %208 = vmatpush1.msra.mxu0 0.0
        %209 = vmatprep.subr.mxu0 0.0
        %210 = vmatpush1.msra.mxu0 0.0
        %211 = vmatprep.subr.mxu0 0.0
        %212 = vmatpush1.msra.mxu0 0.0
        %213 = vmatprep.subr.mxu0 0.0
        %214 = vmatpush1.msra.mxu0 0.0
        %215 = vmatprep.subr.mxu0 0.0
        %216 = vmatpush1.msra.mxu0 0.0
        %217 = vmatprep.subr.mxu0 0.0
        %218 = vmatpush1.msra.mxu0 0.0
        %219 = vmatprep.subr.mxu0 0.0
        %220 = vmatpush1.msra.mxu0 0.0
        %221 = vmatprep.subr.mxu0 0.0
        %222 = vmatpush1.msra.mxu0 0.0
        %223 = vmatprep.subr.mxu0 0.0
        %224 = vmatpush1.msra.mxu0 0.0
        %225 = vmatprep.subr.mxu0 0.0
        %226 = vmatpush1.msra.mxu0 0.0
        %227 = vmatprep.subr.mxu0 0.0
        %228 = vmatpush1.msra.mxu0 0.0
        %229 = vmatprep.subr.mxu0 0.0
        %230 = vmatpush1.msra.mxu0 0.0
        %231 = vmatprep.subr.mxu0 0.0
        %232 = vmatpush1.msra.mxu0 %v176
        %233 = vmatprep.subr.mxu0 0.0
        %234 = vmatpush1.msra.mxu0 %v175
        %235 = vmatprep.subr.mxu0 0.0
        %236 = vmatpush2.msra.mxu0 0.0
        %237 = vmatprep.subr.mxu0 0.0
        %238 = vmatpush2.msra.mxu0 0.0
        %239 = vmatprep.subr.mxu0 0.0
        %240 = vmatpush2.msra.mxu0 0.0
        %241 = vmatprep.subr.mxu0 0.0
        %242 = vmatpush2.msra.mxu0 0.0
        %243 = vmatprep.subr.mxu0 0.0
        %244 = vmatpush2.msra.mxu0 0.0
        %245 = vmatprep.subr.mxu0 0.0
        %246 = vmatpush2.msra.mxu0 0.0
        %247 = vmatprep.subr.mxu0 0.0
        %248 = vmatpush2.msra.mxu0 0.0
        %249 = vmatprep.subr.mxu0 0.0
        %250 = vmatpush2.msra.mxu0 0.0
        %251 = vmatprep.subr.mxu0 0.0
        %252 = vmatpush2.msra.mxu0 0.0
        %253 = vmatprep.subr.mxu0 0.0
        %254 = vmatpush2.msra.mxu0 0.0
        %255 = vmatprep.subr.mxu0 0.0
        %256 = vmatpush2.msra.mxu0 0.0
        %257 = vmatprep.subr.mxu0 0.0
        %258 = vmatpush2.msra.mxu0 0.0
        %259 = vmatprep.subr.mxu0 0.0
        %260 = vmatpush2.msra.mxu0 0.0
        %261 = vmatprep.subr.mxu0 0.0
        %262 = vmatpush2.msra.mxu0 0.0
        %263 = vmatprep.subr.mxu0 0.0
        %264 = vmatpush2.msra.mxu0 0.0
        %265 = vmatprep.subr.mxu0 0.0
        %266 = vmatpush2.msra.mxu0 0.0
        %267 = vmatprep.mubr.f32.mxu0 0.0
        %268 = vmatmul.mubr.f32.gmra.mxu0 %v198
        %v269 = vpop.f32.mrf.mxu0
        %v270 = vadd.f32 %v189, %v269
        %v271 = vpop.f32.mrf.mxu0
        %272 = vmatprep.mubr.f32.mxu0 0.0
        %273 = vmatmul.mubr.f32.gmra.mxu0 %v201
        %v274 = vpop.f32.mrf.mxu0
        %v275 = vadd.f32 %v194, %v274
        %v276 = vpop.f32.mrf.mxu0
        %277 = vdwg.mxu0
        %278 = vmatprep.subr.mxu0 0.0
        %279 = vmatpush1.msra.mxu0 0.0
        %280 = vmatprep.subr.mxu0 0.0
        %281 = vmatpush1.msra.mxu0 0.0
        %282 = vmatprep.subr.mxu0 0.0
        %283 = vmatpush1.msra.mxu0 0.0
        %284 = vmatprep.subr.mxu0 0.0
        %285 = vmatpush1.msra.mxu0 0.0
        %286 = vmatprep.subr.mxu0 0.0
        %287 = vmatpush1.msra.mxu0 0.0
        %288 = vmatprep.subr.mxu0 0.0
        %289 = vmatpush1.msra.mxu0 0.0
        %290 = vmatprep.subr.mxu0 0.0
        %291 = vmatpush1.msra.mxu0 0.0
        %292 = vmatprep.subr.mxu0 0.0
        %293 = vmatpush1.msra.mxu0 0.0
        %294 = vmatprep.subr.mxu0 0.0
        %295 = vmatpush1.msra.mxu0 0.0
        %296 = vmatprep.subr.mxu0 0.0
        %297 = vmatpush1.msra.mxu0 0.0
        %298 = vmatprep.subr.mxu0 0.0
        %299 = vmatpush1.msra.mxu0 0.0
        %300 = vmatprep.subr.mxu0 0.0
        %301 = vmatpush1.msra.mxu0 0.0
        %302 = vmatprep.subr.mxu0 0.0
        %303 = vmatpush1.msra.mxu0 0.0
        %304 = vmatprep.subr.mxu0 0.0
        %305 = vmatpush1.msra.mxu0 0.0
        %306 = vmatprep.subr.mxu0 0.0
        %307 = vmatpush1.msra.mxu0 %v178
        %308 = vmatprep.subr.mxu0 0.0
        %309 = vmatpush1.msra.mxu0 %v177
        %310 = vmatprep.subr.mxu0 0.0
        %311 = vmatpush2.msra.mxu0 0.0
        %312 = vmatprep.subr.mxu0 0.0
        %313 = vmatpush2.msra.mxu0 0.0
        %314 = vmatprep.subr.mxu0 0.0
        %315 = vmatpush2.msra.mxu0 0.0
        %316 = vmatprep.subr.mxu0 0.0
        %317 = vmatpush2.msra.mxu0 0.0
        %318 = vmatprep.subr.mxu0 0.0
        %319 = vmatpush2.msra.mxu0 0.0
        %320 = vmatprep.subr.mxu0 0.0
        %321 = vmatpush2.msra.mxu0 0.0
        %322 = vmatprep.subr.mxu0 0.0
        %323 = vmatpush2.msra.mxu0 0.0
        %324 = vmatprep.subr.mxu0 0.0
        %325 = vmatpush2.msra.mxu0 0.0
        %326 = vmatprep.subr.mxu0 0.0
        %327 = vmatpush2.msra.mxu0 0.0
        %328 = vmatprep.subr.mxu0 0.0
        %329 = vmatpush2.msra.mxu0 0.0
        %330 = vmatprep.subr.mxu0 0.0
        %331 = vmatpush2.msra.mxu0 0.0
        %332 = vmatprep.subr.mxu0 0.0
        %333 = vmatpush2.msra.mxu0 0.0
        %334 = vmatprep.subr.mxu0 0.0
        %335 = vmatpush2.msra.mxu0 0.0
        %336 = vmatprep.subr.mxu0 0.0
        %337 = vmatpush2.msra.mxu0 0.0
        %338 = vmatprep.subr.mxu0 0.0
        %339 = vmatpush2.msra.mxu0 0.0
        %340 = vmatprep.subr.mxu0 0.0
        %341 = vmatpush2.msra.mxu0 0.0
        %342 = vmatprep.mubr.f32.mxu0 0.0
        %343 = vmatmul.mubr.f32.gmra.mxu0 %v198
        %v344 = vpop.f32.mrf.mxu0
        %v345 = vadd.f32 %v189, %v344
        %v346 = vpop.f32.mrf.mxu0
        %347 = vmatprep.mubr.f32.mxu0 0.0
        %348 = vmatmul.mubr.f32.gmra.mxu0 %v201
        %v349 = vpop.f32.mrf.mxu0
        %v350 = vadd.f32 %v194, %v349
        %v351 = vpop.f32.mrf.mxu0
        %352 = vdwg.mxu0
        %v353 = vmax.f32 %v270, 0.0
        %v354 = vmax.f32 %v275, 0.0
        %v355 = vmax.f32 %v345, 0.0
        %v356 = vmax.f32 %v350, 0.0
        %vm357 = vcmask 261120
        %v358 = vsel %vm357, %v353, 0.0
        %359 = vadd.xlane.f32.xlu0 %v358
        %v360 = vpop.xlane.xlu0 %359
        %v361 = vsel %vm357, %v354, 0.0
        %362 = vadd.xlane.f32.xlu0 %v361
        %v363 = vpop.xlane.xlu0 %362
        %v364 = vsel %vm357, %v355, 0.0
        %365 = vadd.xlane.f32.xlu0 %v364
        %v366 = vpop.xlane.xlu0 %365
        %v367 = vsel %vm357, %v356, 0.0
        %368 = vadd.xlane.f32.xlu0 %v367
        %v369 = vpop.xlane.xlu0 %368
        %v370 = vrcp.pop 32.0
        %v371 = vmul.f32 %v360, %v370
        %v372 = vmul.f32 %v363, %v370
        %v373 = vmul.f32 %v366, %v370
        %v374 = vmul.f32 %v369, %v370
        %375 = vrot.lane.b32.xlu0 %v184, 127
        %v376 = vpop.permute.xlu0 %375
        %377 = vrot.lane.b32.xlu0 %v185, 127
        %v378 = vpop.permute.xlu0 %377
        %v382 = vsel %vm196, %v182, 0
        %v385 = vsel %vm196, %v183, 0
        %387 = vmatprep.subr.mxu0 0.0
        %388 = vmatpush1.msra.mxu0 0.0
        %389 = vmatprep.subr.mxu0 0.0
        %390 = vmatpush1.msra.mxu0 0.0
        %391 = vmatprep.subr.mxu0 0.0
        %392 = vmatpush1.msra.mxu0 0.0
        %393 = vmatprep.subr.mxu0 0.0
        %394 = vmatpush1.msra.mxu0 0.0
        %395 = vmatprep.subr.mxu0 0.0
        %396 = vmatpush1.msra.mxu0 0.0
        %397 = vmatprep.subr.mxu0 0.0
        %398 = vmatpush1.msra.mxu0 0.0
        %399 = vmatprep.subr.mxu0 0.0
        %400 = vmatpush1.msra.mxu0 0.0
        %401 = vmatprep.subr.mxu0 0.0
        %402 = vmatpush1.msra.mxu0 0.0
        %403 = vmatprep.subr.mxu0 0.0
        %404 = vmatpush1.msra.mxu0 0.0
        %405 = vmatprep.subr.mxu0 0.0
        %406 = vmatpush1.msra.mxu0 0.0
        %407 = vmatprep.subr.mxu0 0.0
        %408 = vmatpush1.msra.mxu0 0.0
        %409 = vmatprep.subr.mxu0 0.0
        %410 = vmatpush1.msra.mxu0 0.0
        %411 = vmatprep.subr.mxu0 0.0
        %412 = vmatpush1.msra.mxu0 0.0
        %413 = vmatprep.subr.mxu0 0.0
        %414 = vmatpush1.msra.mxu0 0.0
        %415 = vmatprep.subr.mxu0 0.0
        %416 = vmatpush1.msra.mxu0 %v372
        %417 = vmatprep.subr.mxu0 0.0
        %418 = vmatpush1.msra.mxu0 %v371
        %419 = vmatprep.subr.mxu0 0.0
        %420 = vmatpush2.msra.mxu0 0.0
        %421 = vmatprep.subr.mxu0 0.0
        %422 = vmatpush2.msra.mxu0 0.0
        %423 = vmatprep.subr.mxu0 0.0
        %424 = vmatpush2.msra.mxu0 0.0
        %425 = vmatprep.subr.mxu0 0.0
        %426 = vmatpush2.msra.mxu0 0.0
        %427 = vmatprep.subr.mxu0 0.0
        %428 = vmatpush2.msra.mxu0 0.0
        %429 = vmatprep.subr.mxu0 0.0
        %430 = vmatpush2.msra.mxu0 0.0
        %431 = vmatprep.subr.mxu0 0.0
        %432 = vmatpush2.msra.mxu0 0.0
        %433 = vmatprep.subr.mxu0 0.0
        %434 = vmatpush2.msra.mxu0 0.0
        %435 = vmatprep.subr.mxu0 0.0
        %436 = vmatpush2.msra.mxu0 0.0
        %437 = vmatprep.subr.mxu0 0.0
        %438 = vmatpush2.msra.mxu0 0.0
        %439 = vmatprep.subr.mxu0 0.0
        %440 = vmatpush2.msra.mxu0 0.0
        %441 = vmatprep.subr.mxu0 0.0
        %442 = vmatpush2.msra.mxu0 0.0
        %443 = vmatprep.subr.mxu0 0.0
        %444 = vmatpush2.msra.mxu0 0.0
        %445 = vmatprep.subr.mxu0 0.0
        %446 = vmatpush2.msra.mxu0 0.0
        %447 = vmatprep.subr.mxu0 0.0
        %448 = vmatpush2.msra.mxu0 0.0
        %449 = vmatprep.subr.mxu0 0.0
        %450 = vmatpush2.msra.mxu0 0.0
        %451 = vmatprep.mubr.f32.mxu0 0.0
        %452 = vmatmul.mubr.f32.gmra.mxu0 %v382
        %v453 = vpop.f32.mrf.mxu0
        %v454 = vadd.f32 %v376, %v453
        %v455 = vpop.f32.mrf.mxu0
        %456 = vmatprep.mubr.f32.mxu0 0.0
        %457 = vmatmul.mubr.f32.gmra.mxu0 %v385
        %v458 = vpop.f32.mrf.mxu0
        %v459 = vadd.f32 %v378, %v458
        %v460 = vpop.f32.mrf.mxu0
        %461 = vdwg.mxu0
        %462 = vmatprep.subr.mxu0 0.0
        %463 = vmatpush1.msra.mxu0 0.0
        %464 = vmatprep.subr.mxu0 0.0
        %465 = vmatpush1.msra.mxu0 0.0
        %466 = vmatprep.subr.mxu0 0.0
        %467 = vmatpush1.msra.mxu0 0.0
        %468 = vmatprep.subr.mxu0 0.0
        %469 = vmatpush1.msra.mxu0 0.0
        %470 = vmatprep.subr.mxu0 0.0
        %471 = vmatpush1.msra.mxu0 0.0
        %472 = vmatprep.subr.mxu0 0.0
        %473 = vmatpush1.msra.mxu0 0.0
        %474 = vmatprep.subr.mxu0 0.0
        %475 = vmatpush1.msra.mxu0 0.0
        %476 = vmatprep.subr.mxu0 0.0
        %477 = vmatpush1.msra.mxu0 0.0
        %478 = vmatprep.subr.mxu0 0.0
        %479 = vmatpush1.msra.mxu0 0.0
        %480 = vmatprep.subr.mxu0 0.0
        %481 = vmatpush1.msra.mxu0 0.0
        %482 = vmatprep.subr.mxu0 0.0
        %483 = vmatpush1.msra.mxu0 0.0
        %484 = vmatprep.subr.mxu0 0.0
        %485 = vmatpush1.msra.mxu0 0.0
        %486 = vmatprep.subr.mxu0 0.0
        %487 = vmatpush1.msra.mxu0 0.0
        %488 = vmatprep.subr.mxu0 0.0
        %489 = vmatpush1.msra.mxu0 0.0
        %490 = vmatprep.subr.mxu0 0.0
        %491 = vmatpush1.msra.mxu0 %v374
        %492 = vmatprep.subr.mxu0 0.0
        %493 = vmatpush1.msra.mxu0 %v373
        %494 = vmatprep.subr.mxu0 0.0
        %495 = vmatpush2.msra.mxu0 0.0
        %496 = vmatprep.subr.mxu0 0.0
        %497 = vmatpush2.msra.mxu0 0.0
        %498 = vmatprep.subr.mxu0 0.0
        %499 = vmatpush2.msra.mxu0 0.0
        %500 = vmatprep.subr.mxu0 0.0
        %501 = vmatpush2.msra.mxu0 0.0
        %502 = vmatprep.subr.mxu0 0.0
        %503 = vmatpush2.msra.mxu0 0.0
        %504 = vmatprep.subr.mxu0 0.0
        %505 = vmatpush2.msra.mxu0 0.0
        %506 = vmatprep.subr.mxu0 0.0
        %507 = vmatpush2.msra.mxu0 0.0
        %508 = vmatprep.subr.mxu0 0.0
        %509 = vmatpush2.msra.mxu0 0.0
        %510 = vmatprep.subr.mxu0 0.0
        %511 = vmatpush2.msra.mxu0 0.0
        %512 = vmatprep.subr.mxu0 0.0
        %513 = vmatpush2.msra.mxu0 0.0
        %514 = vmatprep.subr.mxu0 0.0
        %515 = vmatpush2.msra.mxu0 0.0
        %516 = vmatprep.subr.mxu0 0.0
        %517 = vmatpush2.msra.mxu0 0.0
        %518 = vmatprep.subr.mxu0 0.0
        %519 = vmatpush2.msra.mxu0 0.0
        %520 = vmatprep.subr.mxu0 0.0
        %521 = vmatpush2.msra.mxu0 0.0
        %522 = vmatprep.subr.mxu0 0.0
        %523 = vmatpush2.msra.mxu0 0.0
        %524 = vmatprep.subr.mxu0 0.0
        %525 = vmatpush2.msra.mxu0 0.0
        %526 = vmatprep.mubr.f32.mxu0 0.0
        %527 = vmatmul.mubr.f32.gmra.mxu0 %v382
        %v528 = vpop.f32.mrf.mxu0
        %v529 = vadd.f32 %v376, %v528
        %v530 = vpop.f32.mrf.mxu0
        %531 = vmatprep.mubr.f32.mxu0 0.0
        %532 = vmatmul.mubr.f32.gmra.mxu0 %v385
        %v533 = vpop.f32.mrf.mxu0
        %v534 = vadd.f32 %v378, %v533
        %v535 = vpop.f32.mrf.mxu0
        %536 = vdwg.mxu0
        %v537 = vxor.u32 %v454, 2147483648
        %v538 = vxor.u32 %v459, 2147483648
        %v539 = vxor.u32 %v529, 2147483648
        %v540 = vxor.u32 %v534, 2147483648
        %v541 = vmul.f32 %v537, 1.442695
        %v542 = vpow.pop %v541
        %v543 = vmul.f32 %v538, 1.442695
        %v544 = vpow.pop %v543
        %v545 = vmul.f32 %v539, 1.442695
        %v546 = vpow.pop %v545
        %v547 = vmul.f32 %v540, 1.442695
        %v548 = vpow.pop %v547
        %v549 = vadd.f32 %v542, 1.0
        %v550 = vadd.f32 %v544, 1.0
        %v551 = vadd.f32 %v546, 1.0
        %v552 = vadd.f32 %v548, 1.0
        %v553 = vrcp.pop %v549
        %v554 = vmul.f32 1.0, %v553
        %v555 = vrcp.pop %v550
        %v556 = vmul.f32 1.0, %v555
        %v557 = vrcp.pop %v551
        %v558 = vmul.f32 1.0, %v557
        %v559 = vrcp.pop %v552
        %v560 = vmul.f32 1.0, %v559
        %562 = vset.pattern.permute.xlu0 0
        %563 = vperm.xlu0 %562, %v554
        %v564 = vpop.permute.xlu0 %563
        %567 = vset.pattern.permute.xlu0 0
        %568 = vperm.xlu0 %567, %v556
        %v569 = vpop.permute.xlu0 %568
        %572 = vset.pattern.permute.xlu0 0
        %573 = vperm.xlu0 %572, %v558
        %v574 = vpop.permute.xlu0 %573
        %577 = vset.pattern.permute.xlu0 0
        %578 = vperm.xlu0 %577, %v560
        %v579 = vpop.permute.xlu0 %578
        %v581 = vmul.f32 %v175, %v564
        %v582 = vmul.f32 %v176, %v569
        %v583 = vmul.f32 %v177, %v574
        %v584 = vmul.f32 %v178, %v579
        %585 = vst.msk [vmem:[%s166] sm:$0xff] %vm357, %v581
        %586 = vst.msk [vmem:[%s166 + $0x8] sm:$0xff] %vm357, %v582
        %587 = vst.msk [vmem:[%s166 + $0x10] sm:$0xff] %vm357, %v583
        %588 = vst.msk [vmem:[%s166 + $0x18] sm:$0xff] %vm357, %v584
        %s589 = sand.u32 %s93, 1
        %s590 = scalar_lea.sflag [#allocation3], %s589
        %s591 = sand.u32 %s93, 1
        %s592 = smul.addr %s591, 32
        %s593 = scalar_lea.vmem [#allocation2], %s592
        // Predicated region
        $region33: #{channel_attention.1} parent=31 // pred_check
          %p594 = pneg %p103
        $region34: #{channel_attention.1} parent=31 // pred_check_branch
          %596 = sbr.rel (%p594) target = $region36
        $region35: #{channel_attention.1} parent=31 // pred_region
          %s597 = smul.u32 2, %s17
          %s599 = ssub.s32 512, 512
          %600 = vsyncadd %s590, %s599
          %s601 = smul.addr %s597, 2
          %s602 = smul.addr %s601, 128
          %s603 = scalar_lea.hbm %s3, %s602
          %s604 = sshll.u32 %s593, 4
          %s605 = int_to_ptr.vmem [resolvable:$true] %s604
          %610 = dma.vmem_to_hbm [thread:$0]  %s605, 512, %s603, %s590, 128, 128, 8
        $region36: #{channel_attention.1} parent=31 // pred_fallthru
          _
      $region32: #{channel_attention.1} parent=5 // pred_fallthru
        _
      %p611 = scmp.le.s32.totalorder 2, %s12
      // Predicated region
      $region37: #{channel_attention.1} parent=5 // pred_check
        %p612 = pneg %p611
      $region38: #{channel_attention.1} parent=5 // pred_check_branch
        %614 = sbr.rel (%p612) target = $region40
      $region39: #{channel_attention.1} parent=5 // pred_region
        %s615 = ssub.s32 %s12, 2
        // Predicated region
        $region41: #{channel_attention.1} parent=39 // pred_check
          %p616 = pneg %p109
        $region42: #{channel_attention.1} parent=39 // pred_check_branch
          %618 = sbr.rel (%p616) target = $region44
        $region43: #{channel_attention.1} parent=39 // pred_region
          %s619 = sand.u32 %s94, 1
          %s620 = scalar_lea.sflag [#allocation3], %s619
          %s621 = sand.u32 %s94, 1
          %s622 = smul.addr %s621, 32
          %s623 = scalar_lea.vmem [#allocation2], %s622
          %624 = dma.done %s620, 512
        $region44: #{channel_attention.1} parent=39 // pred_fallthru
          _
      $region40: #{channel_attention.1} parent=5 // pred_fallthru
        _
    $region6: #{channel_attention.1} parent=1 // loop_footer
      %s16 = sadd.s32 1, %s12
    $region7: #{channel_attention.1} parent=1 // loop_footer_branch
      %11 = sbr.rel target = $region3
    $region8: #{channel_attention.1} parent=1 // loop_exit
      _
    %625 = vsyncpa [#allocation3], 1
    %s626 = scalar_lea.sflag [#allocation3], 1
    %627 = vsyncpa %s626, 1

</llo_original>
